<compile_context>
chip_gen: v7x
topology: tpu7x:2x2x1
jax: 0.10.0
libtpu: 0.0.40
codegen_flags: <defaults>
</compile_context>

<pallas_src>
import jax
import jax.numpy as jnp
from jax.experimental import pallas as pl
from jax.experimental.pallas import tpu as pltpu

_LANE = 128          # lane width of a vreg
_TS_MAX = 4096       # max sublane rows per chunk -> 4096*128*4B = 2 MiB f32 tile


def _iou_partial_kernel(p_ref, t_ref, iand_ref, stp_ref):
    """p_ref/t_ref: (1, TS, 128) chunk of one sample.

    Writes two (1, 1, 8, 128) blocks, each filled with a partial sum:
      iand_ref <- sum(t * p) over this chunk
      stp_ref  <- sum(t + p) over this chunk  (== sum(t) + sum(p))
    """
    p = p_ref[...].astype(jnp.float32)
    t = t_ref[...].astype(jnp.float32)

    # Two full reductions per chunk (instead of three: sum(t)+sum(p) fused).
    iand = jnp.sum(t * p)
    stp = jnp.sum(t + p)

    iand_ref[...] = jnp.full(iand_ref.shape, iand, dtype=jnp.float32)
    stp_ref[...] = jnp.full(stp_ref.shape, stp, dtype=jnp.float32)


def iou_loss(pred: jax.Array, target: jax.Array) -> jax.Array:
    """Pallas TPU implementation of the IOU loss. Inputs are NCHW (f32 or bf16)."""
    assert pred.shape == target.shape and pred.ndim == 4
    B, C, H, W = pred.shape
    L = C * H * W

    # ---- choose a lane-dense chunked layout (minimal padding) -------------
    rows = -(-L // _LANE)                         # ceil(L / 128)
    n_chunks = -(-rows // _TS_MAX)                # number of reduction chunks
    ts = ((-(-rows // n_chunks) + 7) // 8) * 8    # rows per chunk, sublane-aligned
    rows_padded = ts * n_chunks
    l_padded = rows_padded * _LANE

    def to_lane_dense(x):
        x = x.reshape(B, L)
        if l_padded != L:
            # Zero padding is exact: contributes 0 to sum(t*p) and sum(t)+sum(p).
            # (No padding at all when C*H*W is already a multiple of 128*ts,
            #  which is the common case for segmentation masks.)
            x = jnp.pad(x, ((0, 0), (0, l_padded - L)))
        return x.reshape(B, rows_padded, _LANE)

    p3 = to_lane_dense(pred)
    t3 = to_lane_dense(target)

    grid_spec = pltpu.PrefetchScalarGridSpec(
        num_scalar_prefetch=0,
        grid=(B, n_chunks),
        in_specs=[
            pl.BlockSpec((1, ts, _LANE), lambda b, c: (b, c, 0)),
            pl.BlockSpec((1, ts, _LANE), lambda b, c: (b, c, 0)),
        ],
        # One lane-dense (8,128) partial-sum block per (sample, chunk) and per
        # quantity; every grid step writes a distinct block -> no carried
        # state, so both grid axes can be "parallel".
        out_specs=[
            pl.BlockSpec((1, 1, 8, _LANE), lambda b, c: (b, c, 0, 0)),
            pl.BlockSpec((1, 1, 8, _LANE), lambda b, c: (b, c, 0, 0)),
        ],
    )

    iand_part, stp_part = pl.pallas_call(
        _iou_partial_kernel,
        out_shape=(
            jax.ShapeDtypeStruct((B, n_chunks, 8, _LANE), jnp.float32),
            jax.ShapeDtypeStruct((B, n_chunks, 8, _LANE), jnp.float32),
        ),
        grid_spec=grid_spec,
        compiler_params=pltpu.CompilerParams(
            # Every grid step is independent -> shard freely across
            # TensorCores (2x on v7x), even for B == 1.
            dimension_semantics=("parallel", "parallel"),
            # Explicit, generation-safe VMEM budget (usage is ~8 MiB:
            # 2 inputs x 2 pipeline buffers x 2 MiB + tiny outputs).
            vmem_limit_bytes=32 * 1024 * 1024,
        ),
    )(p3, t3)

    # Tiny cross-chunk combine + per-sample finalize in the wrapper.
    iand = jnp.sum(iand_part[:, :, 0, 0], axis=1)        # (B,)
    stp = jnp.sum(stp_part[:, :, 0, 0], axis=1)          # (B,)
    union = stp - iand
    return jnp.sum(1.0 - iand / union) / B


def _iou_ref(pred, target):
    """Pure-JAX reference matching the PyTorch _iou loop exactly."""
    b = pred.shape[0]
    iand = jnp.sum(target * pred, axis=(1, 2, 3))
    ior = jnp.sum(target, axis=(1, 2, 3)) + jnp.sum(pred, axis=(1, 2, 3)) - iand
    return jnp.sum(1.0 - iand / ior) / b


if __name__ == "__main__":
    B, C, H, W = 2, 4, 16, 16
    key = jax.random.PRNGKey(0)
    k1, k2 = jax.random.split(key)

    # pred: soft probabilities in (0, 1); target: binary mask (float).
    pred = jax.nn.sigmoid(jax.random.normal(k1, (B, C, H, W), dtype=jnp.float32))
    target = (jax.random.uniform(k2, (B, C, H, W)) > 0.5).astype(jnp.float32)

    loss = jax.block_until_ready(iou_loss(pred, target))
    ref = jax.block_until_ready(_iou_ref(pred, target))

    assert jnp.allclose(loss, ref, rtol=1e-5, atol=1e-5), (loss, ref)
    print("KERNEL_OK")
</pallas_src>

<mosaic_0001>
module attributes {stable_mosaic.version = 11 : i64} {
  func.func @_iou_partial_kernel(%arg0: i32, %arg1: i32, %arg2: memref<1x8x128xf32, #tpu.memory_space<vmem>>, %arg3: memref<1x8x128xf32, #tpu.memory_space<vmem>>, %arg4: memref<1x1x8x128xf32, #tpu.memory_space<vmem>>, %arg5: memref<1x1x8x128xf32, #tpu.memory_space<vmem>>) attributes {dimension_semantics = [#tpu.dimension_semantics<parallel>, #tpu.dimension_semantics<parallel>], iteration_bounds = array<i64: 2, 1>, scalar_prefetch = 0 : i64, scratch_operands = 0 : i64, tpu.core_type = #tpu.core_type<tc>, window_params = [{transform_indices = @transform_0, window_bounds = array<i64: 1, 8, 128>}, {transform_indices = @transform_1, window_bounds = array<i64: 1, 8, 128>}, {transform_indices = @transform_2, window_bounds = array<i64: 1, 1, 8, 128>}, {transform_indices = @transform_3, window_bounds = array<i64: 1, 1, 8, 128>}]} {
    %c0 = arith.constant 0 : index
    %c0_0 = arith.constant 0 : index
    %c0_1 = arith.constant 0 : index
    %0 = vector.load %arg2[%c0, %c0_0, %c0_1] : memref<1x8x128xf32, #tpu.memory_space<vmem>>, vector<1x8x128xf32>
    %c0_2 = arith.constant 0 : index
    %c0_3 = arith.constant 0 : index
    %c0_4 = arith.constant 0 : index
    %1 = vector.load %arg3[%c0_2, %c0_3, %c0_4] : memref<1x8x128xf32, #tpu.memory_space<vmem>>, vector<1x8x128xf32>
    %2 = arith.mulf %1, %0 : vector<1x8x128xf32>
    %3 = vector.shape_cast %2 : vector<1x8x128xf32> to vector<1x1x8x128xf32>
    %cst = arith.constant dense<0.000000e+00> : vector<1xf32>
    %4 = vector.multi_reduction <add>, %3, %cst [1, 2, 3] : vector<1x1x8x128xf32> to vector<1xf32>
    %5 = vector.shape_cast %4 : vector<1xf32> to vector<1x1x1x1xf32>
    %6 = vector.extract %5[0, 0, 0, 0] : f32 from vector<1x1x1x1xf32>
    %7 = arith.addf %1, %0 : vector<1x8x128xf32>
    %8 = vector.shape_cast %7 : vector<1x8x128xf32> to vector<1x1x8x128xf32>
    %cst_5 = arith.constant dense<0.000000e+00> : vector<1xf32>
    %9 = vector.multi_reduction <add>, %8, %cst_5 [1, 2, 3] : vector<1x1x8x128xf32> to vector<1xf32>
    %10 = vector.shape_cast %9 : vector<1xf32> to vector<1x1x1x1xf32>
    %11 = vector.extract %10[0, 0, 0, 0] : f32 from vector<1x1x1x1xf32>
    %12 = vector.broadcast %6 : f32 to vector<1x1x8x128xf32>
    %c0_6 = arith.constant 0 : index
    %c0_7 = arith.constant 0 : index
    %c0_8 = arith.constant 0 : index
    %c0_9 = arith.constant 0 : index
    %13 = vector.load %arg4[%c0_6, %c0_7, %c0_8, %c0_9] : memref<1x1x8x128xf32, #tpu.memory_space<vmem>>, vector<1x1x8x128xf32>
    tpu.vector_store %arg4[%c0_6, %c0_7, %c0_8, %c0_9], %12 {strides = array<i32>} : memref<1x1x8x128xf32, #tpu.memory_space<vmem>>, vector<1x1x8x128xf32>,
    %14 = vector.broadcast %11 : f32 to vector<1x1x8x128xf32>
    %c0_10 = arith.constant 0 : index
    %c0_11 = arith.constant 0 : index
    %c0_12 = arith.constant 0 : index
    %c0_13 = arith.constant 0 : index
    %15 = vector.load %arg5[%c0_10, %c0_11, %c0_12, %c0_13] : memref<1x1x8x128xf32, #tpu.memory_space<vmem>>, vector<1x1x8x128xf32>
    tpu.vector_store %arg5[%c0_10, %c0_11, %c0_12, %c0_13], %14 {strides = array<i32>} : memref<1x1x8x128xf32, #tpu.memory_space<vmem>>, vector<1x1x8x128xf32>,
    return
  }
  func.func @transform_0(%arg0: i32, %arg1: i32) -> (i32, i32, i32) {
    %c0_i32 = arith.constant 0 : i32
    %c0_i32_0 = arith.constant 0 : i32
    return %arg0, %arg1, %c0_i32 : i32, i32, i32
  }
  func.func @transform_1(%arg0: i32, %arg1: i32) -> (i32, i32, i32) {
    %c0_i32 = arith.constant 0 : i32
    %c0_i32_0 = arith.constant 0 : i32
    return %arg0, %arg1, %c0_i32 : i32, i32, i32
  }
  func.func @transform_2(%arg0: i32, %arg1: i32) -> (i32, i32, i32, i32) {
    %c0_i32 = arith.constant 0 : i32
    %c0_i32_0 = arith.constant 0 : i32
    %c0_i32_1 = arith.constant 0 : i32
    return %arg0, %arg1, %c0_i32, %c0_i32_0 : i32, i32, i32, i32
  }
  func.func @transform_3(%arg0: i32, %arg1: i32) -> (i32, i32, i32, i32) {
    %c0_i32 = arith.constant 0 : i32
    %c0_i32_0 = arith.constant 0 : i32
    %c0_i32_1 = arith.constant 0 : i32
    return %arg0, %arg1, %c0_i32, %c0_i32_0 : i32, i32, i32, i32
  }
}

</mosaic_0001>

<llo_original>
// kernel: tpu_custom_call.1
$region0: #{tpu_custom_call.1}
  #allocation0 [shape = 'u32[]', space=smem, size = 0x4, offset = 0x4, fixed_abs, tag = 'smem constant byte address 0x4 - core index']
  #allocation1 [shape = 'u32[144,128]{1,0:T(1,128)}', space=vmem, size = 0x12000, scoped, tag = 'internal scratch']
  %s0 = inlined_call_operand.hbm [shape: f32[2,8,128], index: 0, kind: input, shape index: {}]
  %s1 = inlined_call_operand.hbm [shape: f32[2,8,128], index: 1, kind: input, shape index: {}]
  %s2 = inlined_call_operand.hbm [shape: f32[2,1,8,128], index: 2, kind: output, shape index: {0}]
  %s3 = inlined_call_operand.hbm [shape: f32[2,1,8,128], index: 3, kind: output, shape index: {1}]
  %4 = xla_tuple %s2, %s3
  %s5 = sld [smem:[#allocation0]]
  $region57: #{tpu_custom_call.1} parent=0
    _
  %s7 = ssub.s32 1, %s5
  %s8 = scalar_select 0, %s7, %s5
  $region1: #{tpu_custom_call.1} parent=0
    #allocation2 [shape = 'u8[8192]{0}', space=vmem, size = 0x2000, scoped, tag = 'input window, operand 0']
    #allocation3 [shape = 's32[2]{0}', space=sflag, size = 0x8, scoped, tag = 'scoped memory for tpu_custom_call.1']
    #allocation4 [shape = 's32[2]{0}', space=sflag, size = 0x8, scoped, tag = 'scoped memory for tpu_custom_call.1']
    #allocation5 [shape = 'u8[8192]{0}', space=vmem, size = 0x2000, scoped, tag = 'input window, operand 1']
    #allocation6 [shape = 's32[2]{0}', space=sflag, size = 0x8, scoped, tag = 'scoped memory for tpu_custom_call.1']
    #allocation7 [shape = 'u8[8192]{0}', space=vmem, size = 0x2000, scoped, tag = 'output window, operand 0']
    #allocation8 [shape = 'u8[8192]{0}', space=vmem, size = 0x2000, scoped, tag = 'output window, operand 1']
    #allocation9 [shape = 's32[2]{0}', space=sflag, size = 0x8, scoped, tag = 'scoped memory for tpu_custom_call.1']
    %9 = vsyncpa [#allocation3], 0
    %s10 = scalar_lea.sflag [#allocation3], 1
    %11 = vsyncpa %s10, 0
    %12 = vsyncpa [#allocation6], 0
    %s13 = scalar_lea.sflag [#allocation6], 1
    %14 = vsyncpa %s13, 0
    %15 = vsyncpa [#allocation4], 0
    %s16 = scalar_lea.sflag [#allocation4], 1
    %17 = vsyncpa %s16, 0
    %18 = vsyncpa [#allocation9], 0
    %s19 = scalar_lea.sflag [#allocation9], 1
    %20 = vsyncpa %s19, 0
    loop: start=0, step=1, limit=4
    $region2: #{tpu_custom_call.1} parent=1 // loop_pre_header
      _
    $region3: #{tpu_custom_call.1} parent=1 // loop_header
      %s22 = sphi 0, %s26
      %p23 = scmp.ge.s32.totalorder %s22, 4
      %s29 = sphi 0, %s41
      %s30 = sphi 0, %s37
      %s31 = sphi 0, %s29
      %s32 = sphi 0, %s30
      %s33 = sphi 0, %s31
      %s34 = sphi 0, %s32
      %s46 = sphi 0, %s48
      %s49 = sphi 0, %s46
      %s50 = sphi 0, %s49
      %s66 = sphi 0, %s50
      %s74 = sphi 0, %s76
      %s77 = sphi 0, %s74
      %s78 = sphi 0, %s77
      %s94 = sphi 0, %s78
      %s102 = sphi 0, %s104
      %s105 = sphi 0, %s102
      %s106 = sphi 0, %s105
      %s122 = sphi 0, %s106
      %s130 = sphi 0, %s132
      %s133 = sphi 0, %s130
      %s134 = sphi 0, %s133
      %s150 = sphi 0, %s134
    $region4: #{tpu_custom_call.1} parent=1 // loop_header_branch
      %25 = sbr.rel (%p23) target = $region8
    $region5: #{tpu_custom_call.1} parent=1 // loop_body
      %s27 = ssub.s32 %s22, 1
      %s28 = ssub.s32 %s22, 2
      %s35 = sadd.s32 1, %s30
      %p36 = scmp.ge.s32.totalorder %s35, 1
      %s37 = scalar_select %p36, 0, %s35
      %s38 = sadd.s32 1, %s29
      %s39 = scalar_select %p36, %s38, %s29
      %p40 = scmp.ge.s32.totalorder %s39, 2
      %s41 = scalar_select %p40, 0, %s39
      %s42 = ssub.s32 %s29, %s41
      %s43 = ssub.s32 %s30, %s37
      %s44 = sor.u32 %s42, %s43
      %p45 = scmp.eq.s32.totalorder %s44, 0
      %s47 = sadd.s32 %s46, 1
      %s48 = scalar_select %p45, %s46, %s47
      %p51 = pneg %p45
      %p52 = scmp.eq.s32.totalorder %s22, 1
      %p53 = por %p51, %p52
      %p54 = scmp.ne.s32.totalorder %s46, %s49
      %p55 = scmp.eq.s32.totalorder %s22, 0
      %p56 = por %p54, %p55
      %p57 = scmp.ne.s32.totalorder %s46, %s49
      %p58 = scmp.eq.s32.totalorder %s27, 1
      %p59 = por %p57, %p58
      %p60 = scmp.ne.s32.totalorder %s49, %s50
      %p61 = scmp.eq.s32.totalorder %s27, 0
      %p62 = por %p60, %p61
      %p63 = scmp.ne.s32.totalorder %s49, %s50
      %p64 = scmp.eq.s32.totalorder %s28, 1
      %p65 = por %p63, %p64
      %p67 = scmp.ne.s32.totalorder %s50, %s66
      %p68 = scmp.eq.s32.totalorder %s28, 0
      %p69 = por %p67, %p68
      %s70 = ssub.s32 %s29, %s41
      %s71 = ssub.s32 %s30, %s37
      %s72 = sor.u32 %s70, %s71
      %p73 = scmp.eq.s32.totalorder %s72, 0
      %s75 = sadd.s32 %s74, 1
      %s76 = scalar_select %p73, %s74, %s75
      %p79 = pneg %p73
      %p80 = scmp.eq.s32.totalorder %s22, 1
      %p81 = por %p79, %p80
      %p82 = scmp.ne.s32.totalorder %s74, %s77
      %p83 = scmp.eq.s32.totalorder %s22, 0
      %p84 = por %p82, %p83
      %p85 = scmp.ne.s32.totalorder %s74, %s77
      %p86 = scmp.eq.s32.totalorder %s27, 1
      %p87 = por %p85, %p86
      %p88 = scmp.ne.s32.totalorder %s77, %s78
      %p89 = scmp.eq.s32.totalorder %s27, 0
      %p90 = por %p88, %p89
      %p91 = scmp.ne.s32.totalorder %s77, %s78
      %p92 = scmp.eq.s32.totalorder %s28, 1
      %p93 = por %p91, %p92
      %p95 = scmp.ne.s32.totalorder %s78, %s94
      %p96 = scmp.eq.s32.totalorder %s28, 0
      %p97 = por %p95, %p96
      %s98 = ssub.s32 %s29, %s41
      %s99 = ssub.s32 %s30, %s37
      %s100 = sor.u32 %s98, %s99
      %p101 = scmp.eq.s32.totalorder %s100, 0
      %s103 = sadd.s32 %s102, 1
      %s104 = scalar_select %p101, %s102, %s103
      %p107 = pneg %p101
      %p108 = scmp.eq.s32.totalorder %s22, 1
      %p109 = por %p107, %p108
      %p110 = scmp.ne.s32.totalorder %s102, %s105
      %p111 = scmp.eq.s32.totalorder %s22, 0
      %p112 = por %p110, %p111
      %p113 = scmp.ne.s32.totalorder %s102, %s105
      %p114 = scmp.eq.s32.totalorder %s27, 1
      %p115 = por %p113, %p114
      %p116 = scmp.ne.s32.totalorder %s105, %s106
      %p117 = scmp.eq.s32.totalorder %s27, 0
      %p118 = por %p116, %p117
      %p119 = scmp.ne.s32.totalorder %s105, %s106
      %p120 = scmp.eq.s32.totalorder %s28, 1
      %p121 = por %p119, %p120
      %p123 = scmp.ne.s32.totalorder %s106, %s122
      %p124 = scmp.eq.s32.totalorder %s28, 0
      %p125 = por %p123, %p124
      %s126 = ssub.s32 %s29, %s41
      %s127 = ssub.s32 %s30, %s37
      %s128 = sor.u32 %s126, %s127
      %p129 = scmp.eq.s32.totalorder %s128, 0
      %s131 = sadd.s32 %s130, 1
      %s132 = scalar_select %p129, %s130, %s131
      %p135 = pneg %p129
      %p136 = scmp.eq.s32.totalorder %s22, 1
      %p137 = por %p135, %p136
      %p138 = scmp.ne.s32.totalorder %s130, %s133
      %p139 = scmp.eq.s32.totalorder %s22, 0
      %p140 = por %p138, %p139
      %p141 = scmp.ne.s32.totalorder %s130, %s133
      %p142 = scmp.eq.s32.totalorder %s27, 1
      %p143 = por %p141, %p142
      %p144 = scmp.ne.s32.totalorder %s133, %s134
      %p145 = scmp.eq.s32.totalorder %s27, 0
      %p146 = por %p144, %p145
      %p147 = scmp.ne.s32.totalorder %s133, %s134
      %p148 = scmp.eq.s32.totalorder %s28, 1
      %p149 = por %p147, %p148
      %p151 = scmp.ne.s32.totalorder %s134, %s150
      %p152 = scmp.eq.s32.totalorder %s28, 0
      %p153 = por %p151, %p152
      %p154 = scmp.le.s32.totalorder 1, %s22
      %p155 = scmp.lt.s32.totalorder %s22, 3
      %p156 = pnand %p154, %p155
      %p157 = pneg %p156
      // Predicated region
      $region9: #{tpu_custom_call.1} parent=5 // pred_check
        _
      $region10: #{tpu_custom_call.1} parent=5 // pred_check_branch
        %159 = sbr.rel (%p156) target = $region12
      $region11: #{tpu_custom_call.1} parent=5 // pred_region
        %s160 = ssub.s32 %s22, 1
      $region12: #{tpu_custom_call.1} parent=5 // pred_fallthru
        _
      %p161 = scmp.lt.s32.totalorder %s22, 2
      // Predicated region
      $region13: #{tpu_custom_call.1} parent=5 // pred_check
        %p162 = pneg %p161
      $region14: #{tpu_custom_call.1} parent=5 // pred_check_branch
        %164 = sbr.rel (%p162) target = $region16
      $region15: #{tpu_custom_call.1} parent=5 // pred_region
        // Predicated region
        $region17: #{tpu_custom_call.1} parent=15 // pred_check
          %p165 = pneg %p56
        $region18: #{tpu_custom_call.1} parent=15 // pred_check_branch
          %167 = sbr.rel (%p165) target = $region20
        $region19: #{tpu_custom_call.1} parent=15 // pred_region
          %s168 = sand.u32 %s46, 1
          %s169 = scalar_lea.sflag [#allocation3], %s168
          %s170 = sand.u32 %s46, 1
          %s171 = smul.addr %s170, 8
          %s172 = scalar_lea.vmem [#allocation2], %s171
          %s174 = ssub.s32 128, 128
          %175 = vsyncadd %s169, %s174
          %s176 = sadd.s32 %s30, %s29
          %s177 = smul.addr %s176, 128
          %s178 = scalar_lea.hbm %s0, %s177
          %s180 = sshll.u32 %s172, 4
          %s181 = int_to_ptr.vmem [resolvable:$true] %s180
          %183 = dma.hbm_to_vmem [thread:$0]  %s178, 128, %s181, %s169
        $region20: #{tpu_custom_call.1} parent=15 // pred_fallthru
          _
        // Predicated region
        $region21: #{tpu_custom_call.1} parent=15 // pred_check
          %p184 = pneg %p84
        $region22: #{tpu_custom_call.1} parent=15 // pred_check_branch
          %186 = sbr.rel (%p184) target = $region24
        $region23: #{tpu_custom_call.1} parent=15 // pred_region
          %s187 = sand.u32 %s74, 1
          %s188 = scalar_lea.sflag [#allocation6], %s187
          %s189 = sand.u32 %s74, 1
          %s190 = smul.addr %s189, 8
          %s191 = scalar_lea.vmem [#allocation5], %s190
          %s193 = ssub.s32 128, 128
          %194 = vsyncadd %s188, %s193
          %s195 = sadd.s32 %s30, %s29
          %s196 = smul.addr %s195, 128
          %s197 = scalar_lea.hbm %s1, %s196
          %s199 = sshll.u32 %s191, 4
          %s200 = int_to_ptr.vmem [resolvable:$true] %s199
          %202 = dma.hbm_to_vmem [thread:$0]  %s197, 128, %s200, %s188
        $region24: #{tpu_custom_call.1} parent=15 // pred_fallthru
          _
      $region16: #{tpu_custom_call.1} parent=5 // pred_fallthru
        _
      %p203 = scmp.le.s32.totalorder 1, %s22
      %p204 = scmp.lt.s32.totalorder %s22, 3
      %p205 = pnand %p203, %p204
      %p206 = pneg %p205
      // Predicated region
      $region25: #{tpu_custom_call.1} parent=5 // pred_check
        _
      $region26: #{tpu_custom_call.1} parent=5 // pred_check_branch
        %208 = sbr.rel (%p205) target = $region28
      $region27: #{tpu_custom_call.1} parent=5 // pred_region
        %s209 = ssub.s32 %s22, 1
        %s210 = sand.u32 %s49, 1
        %s211 = scalar_lea.sflag [#allocation3], %s210
        %s212 = sand.u32 %s49, 1
        %s213 = smul.addr %s212, 8
        %s214 = scalar_lea.vmem [#allocation2], %s213
        // Predicated region
        $region29: #{tpu_custom_call.1} parent=27 // pred_check
          %p215 = pneg %p62
        $region30: #{tpu_custom_call.1} parent=27 // pred_check_branch
          %217 = sbr.rel (%p215) target = $region32
        $region31: #{tpu_custom_call.1} parent=27 // pred_region
          %218 = dma.done %s211, 128
        $region32: #{tpu_custom_call.1} parent=27 // pred_fallthru
          _
        %s219 = sand.u32 %s77, 1
        %s220 = scalar_lea.sflag [#allocation6], %s219
        %s221 = sand.u32 %s77, 1
        %s222 = smul.addr %s221, 8
        %s223 = scalar_lea.vmem [#allocation5], %s222
        // Predicated region
        $region33: #{tpu_custom_call.1} parent=27 // pred_check
          %p224 = pneg %p90
        $region34: #{tpu_custom_call.1} parent=27 // pred_check_branch
          %226 = sbr.rel (%p224) target = $region36
        $region35: #{tpu_custom_call.1} parent=27 // pred_region
          %227 = dma.done %s220, 128
        $region36: #{tpu_custom_call.1} parent=27 // pred_fallthru
          _
        %s228 = sand.u32 %s49, 1
        %s229 = scalar_lea.sflag [#allocation3], %s228
        %s230 = sand.u32 %s49, 1
        %s231 = smul.addr %s230, 8
        %s232 = scalar_lea.vmem [#allocation2], %s231
        %p233 = pneg %p62
        %p234 = pneg %p59
        %s235 = sand.u32 %s77, 1
        %s236 = scalar_lea.sflag [#allocation6], %s235
        %s237 = sand.u32 %s77, 1
        %s238 = smul.addr %s237, 8
        %s239 = scalar_lea.vmem [#allocation5], %s238
        %p240 = pneg %p90
        %p241 = pneg %p87
        %p242 = pneg %p118
        %p243 = pneg %p115
        %s244 = sand.u32 %s105, 1
        %s245 = scalar_lea.sflag [#allocation4], %s244
        %s246 = sand.u32 %s105, 1
        %s247 = smul.addr %s246, 8
        %s248 = scalar_lea.vmem [#allocation7], %s247
        %p249 = pneg %p146
        %p250 = pneg %p143
        %s251 = sand.u32 %s133, 1
        %s252 = scalar_lea.sflag [#allocation9], %s251
        %s253 = sand.u32 %s133, 1
        %s254 = smul.addr %s253, 8
        %s255 = scalar_lea.vmem [#allocation8], %s254
        %v256 = vld [vmem:[%s214] sm:$0xff]
        %v257 = vld [vmem:[%s223] sm:$0xff]
        %v258 = vmul.f32 %v257, %v256
        %259 = vadd.xlane.f32.xlu0 %v258
        %v260 = vpop.xlane.xlu0 %259
        %v261 = vrot.slane %v260, 4
        %v262 = vadd.f32 %v260, %v261
        %v263 = vrot.slane %v262, 2
        %v264 = vadd.f32 %v262, %v263
        %v265 = vrot.slane %v264, 1
        %v266 = vadd.f32 %v264, %v265
        %s267 = vtos %v266
        %v268 = vadd.f32 %v257, %v256
        %269 = vadd.xlane.f32.xlu0 %v268
        %v270 = vpop.xlane.xlu0 %269
        %v271 = vrot.slane %v270, 4
        %v272 = vadd.f32 %v270, %v271
        %v273 = vrot.slane %v272, 2
        %v274 = vadd.f32 %v272, %v273
        %v275 = vrot.slane %v274, 1
        %v276 = vadd.f32 %v274, %v275
        %s277 = vtos %v276
        %v278 = vstv %s267
        %279 = vst [vmem:[%s248] sm:$0xff] %v278
        %v280 = vstv %s277
        %281 = vst [vmem:[%s255] sm:$0xff] %v280
        %s282 = sand.u32 %s105, 1
        %s283 = scalar_lea.sflag [#allocation4], %s282
        %s284 = sand.u32 %s105, 1
        %s285 = smul.addr %s284, 8
        %s286 = scalar_lea.vmem [#allocation7], %s285
        %s287 = sand.u32 %s133, 1
        %s288 = scalar_lea.sflag [#allocation9], %s287
        %s289 = sand.u32 %s133, 1
        %s290 = smul.addr %s289, 8
        %s291 = scalar_lea.vmem [#allocation8], %s290
        // Predicated region
        $region37: #{tpu_custom_call.1} parent=27 // pred_check
          %p292 = pneg %p115
        $region38: #{tpu_custom_call.1} parent=27 // pred_check_branch
          %294 = sbr.rel (%p292) target = $region40
        $region39: #{tpu_custom_call.1} parent=27 // pred_region
          %s296 = ssub.s32 128, 128
          %297 = vsyncadd %s283, %s296
          %s298 = sadd.s32 %s32, %s31
          %s299 = smul.addr %s298, 128
          %s300 = scalar_lea.hbm %s2, %s299
          %s302 = sshll.u32 %s286, 4
          %s303 = int_to_ptr.vmem [resolvable:$true] %s302
          %305 = dma.vmem_to_hbm [thread:$0]  %s303, 128, %s300, %s283
        $region40: #{tpu_custom_call.1} parent=27 // pred_fallthru
          _
        // Predicated region
        $region41: #{tpu_custom_call.1} parent=27 // pred_check
          %p306 = pneg %p143
        $region42: #{tpu_custom_call.1} parent=27 // pred_check_branch
          %308 = sbr.rel (%p306) target = $region44
        $region43: #{tpu_custom_call.1} parent=27 // pred_region
          %s310 = ssub.s32 128, 128
          %311 = vsyncadd %s288, %s310
          %s312 = sadd.s32 %s32, %s31
          %s313 = smul.addr %s312, 128
          %s314 = scalar_lea.hbm %s3, %s313
          %s316 = sshll.u32 %s291, 4
          %s317 = int_to_ptr.vmem [resolvable:$true] %s316
          %319 = dma.vmem_to_hbm [thread:$0]  %s317, 128, %s314, %s288
        $region44: #{tpu_custom_call.1} parent=27 // pred_fallthru
          _
      $region28: #{tpu_custom_call.1} parent=5 // pred_fallthru
        _
      %p320 = scmp.le.s32.totalorder 2, %s22
      // Predicated region
      $region45: #{tpu_custom_call.1} parent=5 // pred_check
        %p321 = pneg %p320
      $region46: #{tpu_custom_call.1} parent=5 // pred_check_branch
        %323 = sbr.rel (%p321) target = $region48
      $region47: #{tpu_custom_call.1} parent=5 // pred_region
        %s324 = ssub.s32 %s22, 2
        // Predicated region
        $region49: #{tpu_custom_call.1} parent=47 // pred_check
          %p325 = pneg %p121
        $region50: #{tpu_custom_call.1} parent=47 // pred_check_branch
          %327 = sbr.rel (%p325) target = $region52
        $region51: #{tpu_custom_call.1} parent=47 // pred_region
          %s328 = sand.u32 %s106, 1
          %s329 = scalar_lea.sflag [#allocation4], %s328
          %s330 = sand.u32 %s106, 1
          %s331 = smul.addr %s330, 8
          %s332 = scalar_lea.vmem [#allocation7], %s331
          %333 = dma.done %s329, 128
        $region52: #{tpu_custom_call.1} parent=47 // pred_fallthru
          _
        // Predicated region
        $region53: #{tpu_custom_call.1} parent=47 // pred_check
          %p334 = pneg %p149
        $region54: #{tpu_custom_call.1} parent=47 // pred_check_branch
          %336 = sbr.rel (%p334) target = $region56
        $region55: #{tpu_custom_call.1} parent=47 // pred_region
          %s337 = sand.u32 %s134, 1
          %s338 = scalar_lea.sflag [#allocation9], %s337
          %s339 = sand.u32 %s134, 1
          %s340 = smul.addr %s339, 8
          %s341 = scalar_lea.vmem [#allocation8], %s340
          %342 = dma.done %s338, 128
        $region56: #{tpu_custom_call.1} parent=47 // pred_fallthru
          _
      $region48: #{tpu_custom_call.1} parent=5 // pred_fallthru
        _
    $region6: #{tpu_custom_call.1} parent=1 // loop_footer
      %s26 = sadd.s32 1, %s22
    $region7: #{tpu_custom_call.1} parent=1 // loop_footer_branch
      %21 = sbr.rel target = $region3
    $region8: #{tpu_custom_call.1} parent=1 // loop_exit
      _
    %343 = vsyncpa [#allocation3], 1
    %s344 = scalar_lea.sflag [#allocation3], 1
    %345 = vsyncpa %s344, 1
    %346 = vsyncpa [#allocation6], 1
    %s347 = scalar_lea.sflag [#allocation6], 1
    %348 = vsyncpa %s347, 1
    %349 = vsyncpa [#allocation4], 1
    %s350 = scalar_lea.sflag [#allocation4], 1
    %351 = vsyncpa %s350, 1
    %352 = vsyncpa [#allocation9], 1
    %s353 = scalar_lea.sflag [#allocation9], 1
    %354 = vsyncpa %s353, 1

</llo_original>
